<compile_context>
chip_gen: v5e
topology: v5e:2x2
jax: 0.10.0
libtpu: 0.0.40
codegen_flags: <defaults>
</compile_context>

<pallas_src>
import functools

import jax
import jax.numpy as jnp
from jax.experimental import pallas as pl
from jax.experimental.pallas import tpu as pltpu

_LANES = 128
_TILE_R_MAX = 1024  # 1024x128 f32 block = 512 KiB; x2 inputs x2 pipeline bufs = 2 MiB


def _round_up(x, m):
    return ((x + m - 1) // m) * m


def _bpr_kernel(pos_ref, neg_ref, out_ref, *, gamma, n_valid, tile_r, tiles_per_core):
    # pos_ref / neg_ref : (tile_r, 128) blocks in native dtype
    # out_ref           : (8, 128) f32 partial-sum block for this core (resident accumulator)
    c = pl.program_id(0)          # core-split index ("parallel")
    t = pl.program_id(1)          # tile index within this core ("arbitrary")

    @pl.when(t == 0)
    def _init():
        out_ref[...] = jnp.zeros_like(out_ref)

    diff = pos_ref[...].astype(jnp.float32) - neg_ref[...].astype(jnp.float32)
    val = -jnp.log(gamma + jax.nn.sigmoid(diff))          # EUP/VPU elementwise

    tile_elems = tile_r * _LANES
    start = (c * tiles_per_core + t) * tile_elems          # first flat element of this tile

    # Fully-valid interior tile: no mask, just fold (tile_r,128) -> (8,128) with VPU adds.
    @pl.when(start + tile_elems <= n_valid)
    def _full():
        out_ref[...] += val.reshape(tile_r // 8, 8, _LANES).sum(axis=0)

    # The single partial tile: mask padding / OOB-read garbage with a select (never multiply).
    @pl.when(jnp.logical_and(start < n_valid, start + tile_elems > n_valid))
    def _partial():
        row = jax.lax.broadcasted_iota(jnp.int32, (tile_r, _LANES), 0)
        col = jax.lax.broadcasted_iota(jnp.int32, (tile_r, _LANES), 1)
        flat = start + row * _LANES + col
        masked = jnp.where(flat < n_valid, val, 0.0)
        out_ref[...] += masked.reshape(tile_r // 8, 8, _LANES).sum(axis=0)

    # Tiles with start >= n_valid (clamped duplicate DMA) contribute nothing.


def bpr_loss(pos_score, neg_score, gamma=1e-10):
    """Pallas TPU implementation of BPRLoss.forward.

    pos_score, neg_score: shape (N,) arrays (any float dtype). Returns f32 scalar.
    """
    assert pos_score.shape == neg_score.shape and pos_score.ndim == 1
    n = pos_score.shape[0]
    assert n > 0, "BPRLoss of an empty batch is undefined (mean over 0 elements)"

    rows = pl.cdiv(n, _LANES)
    pad = rows * _LANES - n
    pos, neg = pos_score, neg_score
    if pad:
        # TODO(synk): this lane-remainder pad still materializes a copy of the input;
        # removing it entirely would need a manual tail DMA (memory_space=pl.ANY).
        pos = jnp.pad(pos, (0, pad))
        neg = jnp.pad(neg, (0, pad))
    pos2d = pos.reshape(rows, _LANES)   # free bitcast when n % 128 == 0
    neg2d = neg.reshape(rows, _LANES)

    tile_r = min(_TILE_R_MAX, _round_up(rows, 8))
    tiles_total = pl.cdiv(rows, tile_r)
    n_split = 2 if tiles_total >= 2 else 1        # shard across the 2 TCs on v7x
    tiles_per_core = pl.cdiv(tiles_total, n_split)

    def in_map(c, t):
        # Clamp so the auto-pipeline never DMAs a fully out-of-bounds block; the kernel
        # skips such (duplicate) tiles via its start >= n_valid check.
        return (jnp.minimum(c * tiles_per_core + t, tiles_total - 1), 0)

    kernel = functools.partial(
        _bpr_kernel,
        gamma=gamma,
        n_valid=n,
        tile_r=tile_r,
        tiles_per_core=tiles_per_core,
    )

    partial_sums = pl.pallas_call(
        kernel,
        out_shape=jax.ShapeDtypeStruct((n_split * 8, _LANES), jnp.float32),
        grid=(n_split, tiles_per_core),
        in_specs=[
            pl.BlockSpec((tile_r, _LANES), in_map),
            pl.BlockSpec((tile_r, _LANES), in_map),
        ],
        out_specs=pl.BlockSpec((8, _LANES), lambda c, t: (c, 0)),
        compiler_params=pltpu.CompilerParams(
            dimension_semantics=("parallel", "arbitrary"),
        ),
    )(pos2d, neg2d)

    # Tiny second-stage reduction of the (n_split*8, 128) partial sums.
    return jnp.sum(partial_sums) / n


def _bpr_loss_ref(pos_score, neg_score, gamma=1e-10):
    p = pos_score.astype(jnp.float32)
    q = neg_score.astype(jnp.float32)
    return -jnp.mean(jnp.log(gamma + jax.nn.sigmoid(p - q)))


if __name__ == "__main__":
    key = jax.random.PRNGKey(0)
    k1, k2, k3, k4 = jax.random.split(key, 4)

    # Small example (N not a multiple of 128 -> exercises the tail mask path).
    n1 = 300
    pos1 = jax.random.normal(k1, (n1,), dtype=jnp.float32)
    neg1 = jax.random.normal(k2, (n1,), dtype=jnp.float32)
    out1 = jax.block_until_ready(bpr_loss(pos1, neg1))
    ref1 = _bpr_loss_ref(pos1, neg1)
    assert jnp.allclose(out1, ref1, rtol=1e-5, atol=1e-6), (out1, ref1)

    # Larger check -> exercises the multi-tile pipelined grid, the 2-way core split
    # and the clamped/skipped trailing tile.
    n2 = 300_000
    pos2 = jax.random.normal(k3, (n2,), dtype=jnp.float32)
    neg2 = jax.random.normal(k4, (n2,), dtype=jnp.float32)
    out2 = jax.block_until_ready(bpr_loss(pos2, neg2))
    ref2 = _bpr_loss_ref(pos2, neg2)
    assert jnp.allclose(out2, ref2, rtol=1e-4, atol=1e-5), (out2, ref2)

    print("KERNEL_OK")
</pallas_src>

<mosaic_0001>
module attributes {stable_mosaic.version = 11 : i64} {
  func.func @_bpr_kernel(%arg0: i32, %arg1: i32, %arg2: memref<8x128xf32, #tpu.memory_space<vmem>>, %arg3: memref<8x128xf32, #tpu.memory_space<vmem>>, %arg4: memref<8x128xf32, #tpu.memory_space<vmem>>) attributes {dimension_semantics = [#tpu.dimension_semantics<parallel>, #tpu.dimension_semantics<arbitrary>], iteration_bounds = array<i64: 1, 1>, scalar_prefetch = 0 : i64, scratch_operands = 0 : i64, tpu.core_type = #tpu.core_type<tc>, window_params = [{transform_indices = @transform_0, window_bounds = array<i64: 8, 128>}, {transform_indices = @transform_1, window_bounds = array<i64: 8, 128>}, {transform_indices = @transform_2, window_bounds = array<i64: 8, 128>}]} {
    %c0_i32 = arith.constant 0 : i32
    %0 = arith.cmpi eq, %arg1, %c0_i32 : i32
    %1 = arith.extui %0 : i1 to i32
    %c0_i32_0 = arith.constant 0 : i32
    %2 = arith.cmpi ne, %1, %c0_i32_0 : i32
    scf.if %2 {
      %cst_12 = arith.constant 0.000000e+00 : f32
      %29 = vector.broadcast %cst_12 : f32 to vector<8x128xf32>
      %c0_13 = arith.constant 0 : index
      %c0_14 = arith.constant 0 : index
      %30 = vector.load %arg4[%c0_13, %c0_14] : memref<8x128xf32, #tpu.memory_space<vmem>>, vector<8x128xf32>
      tpu.vector_store %arg4[%c0_13, %c0_14], %29 {strides = array<i32>} : memref<8x128xf32, #tpu.memory_space<vmem>>, vector<8x128xf32>,
    } else {
    }
    %c0 = arith.constant 0 : index
    %c0_1 = arith.constant 0 : index
    %3 = vector.load %arg2[%c0, %c0_1] : memref<8x128xf32, #tpu.memory_space<vmem>>, vector<8x128xf32>
    %c0_2 = arith.constant 0 : index
    %c0_3 = arith.constant 0 : index
    %4 = vector.load %arg3[%c0_2, %c0_3] : memref<8x128xf32, #tpu.memory_space<vmem>>, vector<8x128xf32>
    %5 = arith.subf %3, %4 : vector<8x128xf32>
    %6 = arith.negf %5 : vector<8x128xf32>
    %7 = math.exp %6 : vector<8x128xf32>
    %cst = arith.constant 1.000000e+00 : f32
    %8 = vector.broadcast %cst : f32 to vector<8x128xf32>
    %9 = arith.addf %8, %7 : vector<8x128xf32>
    %10 = arith.divf %8, %9 : vector<8x128xf32>
    %cst_4 = arith.constant 1.000000e-10 : f32
    %11 = vector.broadcast %cst_4 : f32 to vector<8x128xf32>
    %12 = arith.addf %11, %10 : vector<8x128xf32>
    %13 = math.log %12 : vector<8x128xf32>
    %cst_5 = arith.constant 0.000000e+00 : f32
    %14 = vector.broadcast %cst_5 : f32 to vector<8x128xf32>
    %15 = arith.subf %14, %13 : vector<8x128xf32>
    %c1_i32 = arith.constant 1 : i32
    %16 = arith.muli %arg0, %c1_i32 : i32
    %17 = arith.addi %16, %arg1 : i32
    %c1024_i32 = arith.constant 1024 : i32
    %18 = arith.muli %17, %c1024_i32 : i32
    %c1024_i32_6 = arith.constant 1024 : i32
    %19 = arith.addi %18, %c1024_i32_6 : i32
    %c300_i32 = arith.constant 300 : i32
    %20 = arith.cmpi sle, %19, %c300_i32 : i32
    %21 = arith.extui %20 : i1 to i32
    %c0_i32_7 = arith.constant 0 : i32
    %22 = arith.cmpi ne, %21, %c0_i32_7 : i32
    scf.if %22 {
      %c0_12 = arith.constant 0 : index
      %c0_13 = arith.constant 0 : index
      %29 = vector.load %arg4[%c0_12, %c0_13] : memref<8x128xf32, #tpu.memory_space<vmem>>, vector<8x128xf32>
      %30 = vector.shape_cast %15 : vector<8x128xf32> to vector<1x8x128xf32>
      %cst_14 = arith.constant dense<0.000000e+00> : vector<8x128xf32>
      %31 = vector.multi_reduction <add>, %30, %cst_14 [0] : vector<1x8x128xf32> to vector<8x128xf32>
      %32 = arith.addf %29, %31 : vector<8x128xf32>
      %c0_15 = arith.constant 0 : index
      %c0_16 = arith.constant 0 : index
      %33 = vector.load %arg4[%c0_15, %c0_16] : memref<8x128xf32, #tpu.memory_space<vmem>>, vector<8x128xf32>
      tpu.vector_store %arg4[%c0_15, %c0_16], %32 {strides = array<i32>} : memref<8x128xf32, #tpu.memory_space<vmem>>, vector<8x128xf32>,
    } else {
    }
    %c300_i32_8 = arith.constant 300 : i32
    %23 = arith.cmpi slt, %18, %c300_i32_8 : i32
    %c1024_i32_9 = arith.constant 1024 : i32
    %24 = arith.addi %18, %c1024_i32_9 : i32
    %c300_i32_10 = arith.constant 300 : i32
    %25 = arith.cmpi sgt, %24, %c300_i32_10 : i32
    %26 = arith.andi %23, %25 : i1
    %27 = arith.extui %26 : i1 to i32
    %c0_i32_11 = arith.constant 0 : i32
    %28 = arith.cmpi ne, %27, %c0_i32_11 : i32
    scf.if %28 {
      %29 = tpu.iota {dimensions = array<i32: 0>} : vector<8x128xi32>
      %30 = tpu.iota {dimensions = array<i32: 1>} : vector<8x128xi32>
      %c128_i32 = arith.constant 128 : i32
      %31 = vector.broadcast %c128_i32 : i32 to vector<8x128xi32>
      %32 = arith.muli %29, %31 : vector<8x128xi32>
      %33 = vector.broadcast %18 : i32 to vector<8x128xi32>
      %34 = arith.addi %33, %32 : vector<8x128xi32>
      %35 = arith.addi %34, %30 : vector<8x128xi32>
      %c300_i32_12 = arith.constant 300 : i32
      %36 = vector.broadcast %c300_i32_12 : i32 to vector<8x128xi32>
      %37 = arith.cmpi slt, %35, %36 : vector<8x128xi32>
      %cst_13 = arith.constant 0.000000e+00 : f32
      %38 = vector.broadcast %cst_13 : f32 to vector<8x128xf32>
      %39 = arith.select %37, %15, %38 : vector<8x128xi1>, vector<8x128xf32>
      %c0_14 = arith.constant 0 : index
      %c0_15 = arith.constant 0 : index
      %40 = vector.load %arg4[%c0_14, %c0_15] : memref<8x128xf32, #tpu.memory_space<vmem>>, vector<8x128xf32>
      %41 = vector.shape_cast %39 : vector<8x128xf32> to vector<1x8x128xf32>
      %cst_16 = arith.constant dense<0.000000e+00> : vector<8x128xf32>
      %42 = vector.multi_reduction <add>, %41, %cst_16 [0] : vector<1x8x128xf32> to vector<8x128xf32>
      %43 = arith.addf %40, %42 : vector<8x128xf32>
      %c0_17 = arith.constant 0 : index
      %c0_18 = arith.constant 0 : index
      %44 = vector.load %arg4[%c0_17, %c0_18] : memref<8x128xf32, #tpu.memory_space<vmem>>, vector<8x128xf32>
      tpu.vector_store %arg4[%c0_17, %c0_18], %43 {strides = array<i32>} : memref<8x128xf32, #tpu.memory_space<vmem>>, vector<8x128xf32>,
    } else {
    }
    return
  }
  func.func @transform_0(%arg0: i32, %arg1: i32) -> (i32, i32) {
    %c1_i32 = arith.constant 1 : i32
    %0 = arith.muli %arg0, %c1_i32 : i32
    %1 = arith.addi %0, %arg1 : i32
    %c0_i32 = arith.constant 0 : i32
    %2 = arith.minsi %1, %c0_i32 : i32
    %c0_i32_0 = arith.constant 0 : i32
    %c0_i32_1 = arith.constant 0 : i32
    return %2, %c0_i32_0 : i32, i32
  }
  func.func @transform_1(%arg0: i32, %arg1: i32) -> (i32, i32) {
    %c1_i32 = arith.constant 1 : i32
    %0 = arith.muli %arg0, %c1_i32 : i32
    %1 = arith.addi %0, %arg1 : i32
    %c0_i32 = arith.constant 0 : i32
    %2 = arith.minsi %1, %c0_i32 : i32
    %c0_i32_0 = arith.constant 0 : i32
    %c0_i32_1 = arith.constant 0 : i32
    return %2, %c0_i32_0 : i32, i32
  }
  func.func @transform_2(%arg0: i32, %arg1: i32) -> (i32, i32) {
    %c0_i32 = arith.constant 0 : i32
    %c0_i32_0 = arith.constant 0 : i32
    return %arg0, %c0_i32 : i32, i32
  }
}

</mosaic_0001>

<llo_original>
// kernel: tpu_custom_call.1
$region0: #{tpu_custom_call.1}
  #allocation0 [shape = 'u32[]', space=smem, size = 0x4, offset = 0x4, fixed_abs, tag = 'smem constant byte address 0x4 - core index']
  #allocation1 [shape = 'u32[72,128]{1,0:T(1,128)}', space=vmem, size = 0x9000, scoped, tag = 'internal scratch']
  %s0 = inlined_call_operand.hbm [shape: f32[3,128], index: 0, kind: input, shape index: {}]
  %s1 = inlined_call_operand.hbm [shape: f32[3,128], index: 1, kind: input, shape index: {}]
  %s2 = inlined_call_operand.hbm [shape: f32[8,128], index: 2, kind: output, shape index: {}]
  %s3 = sld [smem:[#allocation0]]
  $region38: #{tpu_custom_call.1} parent=0
    _
  %s5 = ssub.s32 1, %s3
  %s6 = scalar_select 0, %s5, %s3
  $region1: #{tpu_custom_call.1} parent=0
    #allocation2 [shape = 'u8[4096]{0}', space=vmem, size = 0x1000, scoped, tag = 'input window, operand 0, single buffered']
    #allocation3 [shape = 's32[1]{0}', space=sflag, size = 0x4, scoped, tag = 'scoped memory for tpu_custom_call.1']
    #allocation4 [shape = 's32[1]{0}', space=sflag, size = 0x4, scoped, tag = 'scoped memory for tpu_custom_call.1']
    #allocation5 [shape = 'u8[4096]{0}', space=vmem, size = 0x1000, scoped, tag = 'input window, operand 1, single buffered']
    #allocation6 [shape = 's32[1]{0}', space=sflag, size = 0x4, scoped, tag = 'scoped memory for tpu_custom_call.1']
    #allocation7 [shape = 'u8[4096]{0}', space=vmem, size = 0x1000, scoped, tag = 'output window, operand 0, single buffered']
    %7 = vsyncpa [#allocation3], 0
    %8 = vsyncpa [#allocation6], 0
    %9 = vsyncpa [#allocation4], 0
    // Predicated region
    $region2: #{tpu_custom_call.1} parent=1 // pred_check
      _
    $region3: #{tpu_custom_call.1} parent=1 // pred_check_branch
      %11 = sbr.rel (0) target = $region5
    $region4: #{tpu_custom_call.1} parent=1 // pred_region
      %s12 = sadd.s32 0, 0
      %p13 = scmp.lt.s32.totalorder %s12, 0
      %s14 = scalar_select %p13, %s12, 0
      %s15 = smul.u32 2, %s14
      %s16 = ssub.s32 1, %s15
      %s17 = smul.u32 4, %s16
      %s18 = ssub.s32 8, %s17
      %s19 = sshll.u32 %s18, 4
      %20 = vsyncadd [#allocation3], %s19
      %p21 = scmp.ne.s32.totalorder 0, %s17
      %s22 = smul.addr %s15, 4
      %s23 = scalar_lea.hbm %s0, %s22
      %s24 = smul.u32 4, %s16
      %s25 = sshll.u32 %s23, 4
      %s26 = int_to_ptr.hbm [resolvable:$true] %s25
      %s27 = sshll.u32 [#allocation2], 4
      %s28 = int_to_ptr.vmem [resolvable:$true] %s27
      %s29 = sshll.u32 %s24, 4
      %33 = dma.hbm_to_vmem [thread:$0]  (%p21), %s26, %s29, %s28, [#allocation3], 64, 64, 4
    $region5: #{tpu_custom_call.1} parent=1 // pred_fallthru
      _
    // Predicated region
    $region6: #{tpu_custom_call.1} parent=1 // pred_check
      _
    $region7: #{tpu_custom_call.1} parent=1 // pred_check_branch
      %35 = sbr.rel (0) target = $region9
    $region8: #{tpu_custom_call.1} parent=1 // pred_region
      %s36 = sadd.s32 0, 0
      %p37 = scmp.lt.s32.totalorder %s36, 0
      %s38 = scalar_select %p37, %s36, 0
      %s39 = smul.u32 2, %s38
      %s40 = ssub.s32 1, %s39
      %s41 = smul.u32 4, %s40
      %s42 = ssub.s32 8, %s41
      %s43 = sshll.u32 %s42, 4
      %44 = vsyncadd [#allocation6], %s43
      %p45 = scmp.ne.s32.totalorder 0, %s41
      %s46 = smul.addr %s39, 4
      %s47 = scalar_lea.hbm %s1, %s46
      %s48 = smul.u32 4, %s40
      %s49 = sshll.u32 %s47, 4
      %s50 = int_to_ptr.hbm [resolvable:$true] %s49
      %s51 = sshll.u32 [#allocation5], 4
      %s52 = int_to_ptr.vmem [resolvable:$true] %s51
      %s53 = sshll.u32 %s48, 4
      %57 = dma.hbm_to_vmem [thread:$0]  (%p45), %s50, %s53, %s52, [#allocation6], 64, 64, 4
    $region9: #{tpu_custom_call.1} parent=1 // pred_fallthru
      _
    // Predicated region
    $region10: #{tpu_custom_call.1} parent=1 // pred_check
      _
    $region11: #{tpu_custom_call.1} parent=1 // pred_check_branch
      %59 = sbr.rel (0) target = $region13
    $region12: #{tpu_custom_call.1} parent=1 // pred_region
      %61 = dma.done [#allocation3], 128
    $region13: #{tpu_custom_call.1} parent=1 // pred_fallthru
      _
    // Predicated region
    $region14: #{tpu_custom_call.1} parent=1 // pred_check
      _
    $region15: #{tpu_custom_call.1} parent=1 // pred_check_branch
      %63 = sbr.rel (0) target = $region17
    $region16: #{tpu_custom_call.1} parent=1 // pred_region
      %65 = dma.done [#allocation6], 128
    $region17: #{tpu_custom_call.1} parent=1 // pred_fallthru
      _
    %s66 = sadd.s32 0, 0
    %p67 = scmp.lt.s32.totalorder %s66, 0
    %s68 = scalar_select %p67, %s66, 0
    %s69 = smul.u32 2, %s68
    %s70 = ssub.s32 1, %s69
    %s71 = smul.u32 4, %s70
    %s72 = sadd.s32 0, 0
    %p73 = scmp.lt.s32.totalorder %s72, 0
    %s74 = scalar_select %p73, %s72, 0
    %s75 = smul.u32 2, %s74
    %s76 = ssub.s32 1, %s75
    %s77 = smul.u32 4, %s76
    %p78 = scmp.eq.s32.totalorder 0, 0
    // Predicated region
    $region18: #{tpu_custom_call.1} parent=1 // pred_check
      %p79 = pneg %p78
    $region19: #{tpu_custom_call.1} parent=1 // pred_check_branch
      %81 = sbr.rel (%p79) target = $region21
    $region20: #{tpu_custom_call.1} parent=1 // pred_region
      %82 = vst [vmem:[#allocation7] sm:$0xff] 0.0
    $region21: #{tpu_custom_call.1} parent=1 // pred_fallthru
      _
    %v83 = vld [vmem:[#allocation2] sm:$0xff]
    %v84 = vld [vmem:[#allocation5] sm:$0xff]
    %v85 = vsub.f32 %v83, %v84
    %v86 = vxor.u32 %v85, 2147483648
    %v87 = vmul.f32 %v86, 1.442695
    %v88 = vpow.pop %v87
    %v89 = vadd.f32 %v88, 1.0
    %v90 = vrcp.pop %v89
    %v91 = vmul.f32 %v89, %v90
    %v92 = vsub.f32 1.0, %v91
    %v93 = vmul.f32 %v90, %v92
    %v94 = vadd.f32 %v90, %v93
    %vm95 = vweird.f32 %v89
    %vm96 = vweird.f32 %v90
    %vm97 = vmor %vm95, %vm96
    %v98 = vsel %vm97, %v90, %v94
    %v99 = vand.u32 2147483647, %v89
    %vm100 = vcmp.eq.f32.partialorder %v99, 8.507059e+37
    %v101 = vand.u32 %v89, 2147483648
    %v102 = vor.u32 1.1754944e-38, %v101
    %v103 = vsel %vm100, %v102, %v98
    %v104 = vmul.f32 1.0, %v103
    %v105 = vadd.f32 %v104, 1e-10
    %v106 = vlog2.pop %v105
    %v107 = vmul.f32 %v106, 0.6931472
    %v108 = vsub.f32 0.0, %v107
    %s109 = sadd.s32 0, 0
    %s110 = smul.u32 %s109, 1024
    %s111 = sadd.s32 %s110, 1024
    %p112 = scmp.le.s32.totalorder %s111, 300
    // Predicated region
    $region22: #{tpu_custom_call.1} parent=1 // pred_check
      %p113 = pneg %p112
    $region23: #{tpu_custom_call.1} parent=1 // pred_check_branch
      %115 = sbr.rel (%p113) target = $region25
    $region24: #{tpu_custom_call.1} parent=1 // pred_region
      %v116 = vld [vmem:[#allocation7] sm:$0xff]
      %v117 = vadd.f32 %v108, 0.0
      %v118 = vadd.f32 %v116, %v117
      %119 = vst [vmem:[#allocation7] sm:$0xff] %v118
    $region25: #{tpu_custom_call.1} parent=1 // pred_fallthru
      _
    %p120 = scmp.lt.s32.totalorder %s110, 300
    %p121 = scmp.gt.s32.totalorder %s111, 300
    %p122 = pnand %p120, %p121
    %p123 = pneg %p122
    // Predicated region
    $region26: #{tpu_custom_call.1} parent=1 // pred_check
      _
    $region27: #{tpu_custom_call.1} parent=1 // pred_check_branch
      %125 = sbr.rel (%p122) target = $region29
    $region28: #{tpu_custom_call.1} parent=1 // pred_region
      %v126 = vlaneseq
      %v127 = vshrl.u32 %v126, 7
      %v128 = vlaneseq
      %v129 = vand.u32 %v128, 127
      %v130 = vmul.u32 %v127, 128
      %v131 = vstv %s110
      %v132 = vadd.s32 %v131, %v130
      %v133 = vadd.s32 %v132, %v129
      %vm134 = vcmp.lt.s32.totalorder %v133, 300
      %v135 = vsel %vm134, %v108, 0.0
      %v136 = vld [vmem:[#allocation7] sm:$0xff]
      %v137 = vadd.f32 %v135, 0.0
      %v138 = vadd.f32 %v136, %v137
      %139 = vst [vmem:[#allocation7] sm:$0xff] %v138
    $region29: #{tpu_custom_call.1} parent=1 // pred_fallthru
      _
    // Predicated region
    $region30: #{tpu_custom_call.1} parent=1 // pred_check
      _
    $region31: #{tpu_custom_call.1} parent=1 // pred_check_branch
      %141 = sbr.rel (0) target = $region33
    $region32: #{tpu_custom_call.1} parent=1 // pred_region
      %143 = vsyncadd [#allocation4], 0
      %s145 = sshll.u32 [#allocation7], 4
      %s146 = int_to_ptr.vmem [resolvable:$true] %s145
      %s147 = sshll.u32 %s2, 4
      %s148 = int_to_ptr.hbm [resolvable:$true] %s147
      %150 = dma.vmem_to_hbm [thread:$0]  %s146, 128, %s148, [#allocation4]
    $region33: #{tpu_custom_call.1} parent=1 // pred_fallthru
      _
    // Predicated region
    $region34: #{tpu_custom_call.1} parent=1 // pred_check
      _
    $region35: #{tpu_custom_call.1} parent=1 // pred_check_branch
      %152 = sbr.rel (0) target = $region37
    $region36: #{tpu_custom_call.1} parent=1 // pred_region
      %154 = dma.done [#allocation4], 128
    $region37: #{tpu_custom_call.1} parent=1 // pred_fallthru
      _
    %155 = vsyncpa [#allocation3], 1
    %156 = vsyncpa [#allocation6], 1
    %157 = vsyncpa [#allocation4], 1

</llo_original>
